<compile_context>
chip_gen: v6e
topology: v6e:2x2x1
jax: 0.10.0
libtpu: 0.0.40
codegen_flags: <defaults>
</compile_context>

<pallas_src>
import functools

import numpy as np
import jax
import jax.numpy as jnp
from jax.experimental import pallas as pl
from jax.experimental.pallas import tpu as pltpu


def _round_up(v: int, m: int) -> int:
    return (v + m - 1) // m * m


def _cdiv(a: int, b: int) -> int:
    return (a + b - 1) // b


def _balanced_tile(total: int, cap: int, gran: int) -> int:
    """Tile size <= cap, multiple of gran, balanced to minimize padding waste."""
    total = _round_up(max(total, gran), gran)
    n_blocks = _cdiv(total, cap)
    return _round_up(_cdiv(total, n_blocks), gran)


def _vmem_physical_bytes() -> int:
    try:
        return int(pltpu.get_tpu_info().vmem_capacity_bytes)
    except Exception:
        return 64 << 20  # conservative default: v7x per-TensorCore VMEM


# ---------------------------------------------------------------------------
# Pallas kernel: dropout(eval) -> A @ XW (K-tiled accumulation) -> +b, ReLU -> (Linear2)
# ---------------------------------------------------------------------------
def _gnn_fused_kernel(a_ref, xw_ref, bf_ref, *rest, apply_final):
    # dropout: eval-mode (identity).
    # TODO(synk): training-mode dropout would use pltpu.prng_seed + prng_random_bits.
    if apply_final:
        w2_ref, b2_ref, out_ref, acc_ref = rest
    else:
        out_ref, acc_ref = rest

    k = pl.program_id(1)

    @pl.when(k == 0)
    def _():
        acc_ref[...] = jnp.zeros_like(acc_ref)

    # Streamed contraction over the node (K) axis: acc += A_tile @ XW_tile  (f32 acc).
    acc_ref[...] += jnp.dot(a_ref[...], xw_ref[...],
                            preferred_element_type=jnp.float32)

    @pl.when(k == pl.num_programs(1) - 1)
    def _():
        # Bias + ReLU in f32 (safe on v5e: no bf16 VPU).  The final Linear is tiny
        # (h2_pad x out_pad) and stays in f32 to avoid a second bf16 rounding.
        z = jnp.maximum(acc_ref[...] + bf_ref[...], 0.0)
        if apply_final:
            z = jnp.dot(z, w2_ref[...], preferred_element_type=jnp.float32) + b2_ref[...]
        out_ref[...] = z.astype(out_ref.dtype)


# ---------------------------------------------------------------------------
# Wrapper
# ---------------------------------------------------------------------------
def intermediate_model_forward(adj, x, params, *, hidden_layer=False,
                               compute_dtype=jnp.bfloat16):
    """Fused forward pass.

    hidden_layer=True mirrors the PyTorch branch: len(following_layers) == 3 > 2,
    so only following_layers[:-1] (Linear + ReLU) are applied.
    """
    w_agg, b_agg, w1, b1, w2, b2 = params
    n = x.shape[0]

    # ---- algebraic folds + hoisted X @ W_fused (computed once, in f32) ----
    w_mean = jnp.mean(w_agg.astype(jnp.float32), axis=0)                    # (F, H)
    b_mean = jnp.mean(b_agg.astype(jnp.float32), axis=0)                    # (H,)
    w_f = w_mean @ w1.astype(jnp.float32)                                   # (F, H2)
    b_f = b_mean @ w1.astype(jnp.float32) + b1.reshape(-1).astype(jnp.float32)  # (H2,)
    xw = x.astype(jnp.float32) @ w_f                                        # (N, H2) hoisted

    apply_final = not hidden_layer
    h2 = w_f.shape[1]
    out_dim = w2.shape[1] if apply_final else h2
    h2_pad = _round_up(h2, 128)          # lane-dense intermediate (MXU N / K dims)
    out_pad = _round_up(out_dim, 128)    # lane-dense output stores

    # ---- tile selection against a full working-set VMEM budget ----
    bytes_c = np.dtype(compute_dtype).itemsize
    vmem_phys = _vmem_physical_bytes()
    vmem_limit = min(int(vmem_phys * 3 // 4), 96 << 20)   # v5e/v6e: 96 MiB, v7x: 48 MiB
    budget = int(vmem_limit * 3 // 4)

    def working_set(tm_, tk_):
        ws = 2 * tm_ * tk_ * bytes_c                 # A tiles (double-buffered)
        ws += 2 * tk_ * h2_pad * bytes_c             # XW tiles (double-buffered)
        ws += tm_ * h2_pad * 4                       # f32 accumulator scratch
        ws += 2 * tm_ * out_pad * 4                  # output tiles (double-buffered, f32)
        ws += h2_pad * 4                             # fused bias (single-buffered)
        if apply_final:
            ws += h2_pad * out_pad * 4 + out_pad * 4  # W2 / b2 (f32, single copy)
        ws += 2 * tm_ * max(h2_pad, out_pad) * 4      # headroom for in-kernel temporaries
        return ws

    tm = _balanced_tile(n, 1024, 8)      # row tile (sublane / MXU-M granularity)
    tk = _balanced_tile(n, 2048, 128)    # contraction tile (lane granularity)
    while working_set(tm, tk) > budget:
        if tk > 128 and (tk >= tm or tm <= 8):
            tk = max(128, _round_up(tk // 2, 128))
        elif tm > 8:
            tm = max(8, _round_up(tm // 2, 8))
        else:
            break

    n_pad = _round_up(n, tm)
    k_pad = _round_up(n, tk)
    grid = (n_pad // tm, k_pad // tk)

    # ---- pad + cast in one pass, directly in the target dtype ----
    def pad_cast(a, shape, dtype):
        if tuple(a.shape) == tuple(shape):
            return a.astype(dtype)
        buf = jnp.zeros(shape, dtype)
        return buf.at[tuple(slice(0, s) for s in a.shape)].set(a.astype(dtype))

    adj_c = pad_cast(adj, (n_pad, k_pad), compute_dtype)   # dominant HBM traffic (N^2)
    xw_c = pad_cast(xw, (k_pad, h2_pad), compute_dtype)
    bf_p = pad_cast(b_f.reshape(1, -1), (1, h2_pad), jnp.float32)
    args = [adj_c, xw_c, bf_p]
    if apply_final:
        args += [pad_cast(w2, (h2_pad, out_pad), jnp.float32),
                 pad_cast(b2.reshape(1, -1), (1, out_pad), jnp.float32)]

    flops = 2 * n_pad * k_pad * h2_pad
    if apply_final:
        flops += 2 * n_pad * h2_pad * out_pad
    bytes_accessed = (int(adj_c.size) * bytes_c + int(xw_c.size) * bytes_c
                      + n_pad * out_pad * 4
                      + sum(int(a.size) * a.dtype.itemsize for a in args[2:]))
    cost = pl.CostEstimate(flops=int(flops), transcendentals=0,
                           bytes_accessed=int(bytes_accessed))

    kernel = functools.partial(_gnn_fused_kernel, apply_final=apply_final)

    def build(single_buffer_consts):
        def const_spec(shape):
            if single_buffer_consts:
                # Replicated across the grid -> single buffer (halves its VMEM footprint).
                return pl.BlockSpec(shape, lambda i, k: (0, 0),
                                    pipeline_mode=pl.Buffered(1))
            return pl.BlockSpec(shape, lambda i, k: (0, 0))

        in_specs = [
            pl.BlockSpec((tm, tk), lambda i, k: (i, k)),        # A: (row, K) tile
            pl.BlockSpec((tk, h2_pad), lambda i, k: (k, 0)),    # XW: K tile
            const_spec((1, h2_pad)),                            # fused bias
        ]
        if apply_final:
            in_specs += [const_spec((h2_pad, out_pad)),          # W2
                         const_spec((1, out_pad))]               # b2

        return pl.pallas_call(
            kernel,
            out_shape=jax.ShapeDtypeStruct((n_pad, out_pad), jnp.float32),
            grid=grid,
            in_specs=in_specs,
            out_specs=pl.BlockSpec((tm, out_pad), lambda i, k: (i, 0)),
            scratch_shapes=[pltpu.VMEM((tm, h2_pad), jnp.float32)],
            compiler_params=pltpu.CompilerParams(
                dimension_semantics=("parallel", "arbitrary"),
                vmem_limit_bytes=vmem_limit),
            cost_estimate=cost,
        )

    try:
        out = jax.block_until_ready(build(single_buffer_consts=True)(*args))
    except Exception:
        # Fallback if this JAX build rejects single-buffered (Buffered(1)) BlockSpecs.
        out = build(single_buffer_consts=False)(*args)

    return out[:n, :out_dim]


# ---------------------------------------------------------------------------
# Pure-JAX reference (mirrors the PyTorch forward exactly)
# ---------------------------------------------------------------------------
def reference_forward(adj, x, params, *, hidden_layer=False):
    w_agg, b_agg, w1, b1, w2, b2 = params
    # dropout (eval) -> identity
    ax = adj @ x                                               # (N, F)
    h3 = jnp.einsum("nf,kfh->nkh", ax, w_agg) + b_agg[None]    # (N, heads, H)  3-D
    y = h3.mean(axis=1)                                        # mean over dim=1
    z = jnp.maximum(y @ w1 + b1, 0.0)                          # Linear + ReLU
    if hidden_layer:
        return z
    return z @ w2 + b2                                         # final Linear


# ---------------------------------------------------------------------------
# Main
# ---------------------------------------------------------------------------
if __name__ == "__main__":
    N, F_IN, HEADS, HID, HID2, C = 16, 32, 4, 32, 32, 8

    key = jax.random.PRNGKey(0)
    k_adj, k_x, k_wa, k_ba, k_w1, k_b1, k_w2, k_b2 = jax.random.split(key, 8)

    # Deterministic random graph -> row-normalized dense adjacency (with self loops).
    raw = (jax.random.uniform(k_adj, (N, N)) < 0.3).astype(jnp.float32)
    raw = raw + jnp.eye(N, dtype=jnp.float32)
    adj = raw / jnp.sum(raw, axis=1, keepdims=True)

    x = jax.random.normal(k_x, (N, F_IN), dtype=jnp.float32)

    # Deterministic parameter init (scaled normals).
    w_agg = jax.random.normal(k_wa, (HEADS, F_IN, HID), dtype=jnp.float32) * (1.0 / F_IN ** 0.5)
    b_agg = jax.random.normal(k_ba, (HEADS, HID), dtype=jnp.float32) * 0.01
    w1 = jax.random.normal(k_w1, (HID, HID2), dtype=jnp.float32) * (1.0 / HID ** 0.5)
    b1 = jax.random.normal(k_b1, (1, HID2), dtype=jnp.float32) * 0.01
    w2 = jax.random.normal(k_w2, (HID2, C), dtype=jnp.float32) * (1.0 / HID2 ** 0.5)
    b2 = jax.random.normal(k_b2, (1, C), dtype=jnp.float32) * 0.01

    params = (w_agg, b_agg, w1, b1, w2, b2)

    # Full forward path, f32 MXU operands (tight tolerance).
    out = intermediate_model_forward(adj, x, params, hidden_layer=False,
                                     compute_dtype=jnp.float32)
    out = jax.block_until_ready(out)
    ref = reference_forward(adj, x, params, hidden_layer=False)
    assert out.shape == (N, C)
    assert jnp.allclose(out, ref, atol=1e-4, rtol=1e-4), "full-path mismatch"

    # hidden_layer=True path (len(following_layers)=3 > 2 -> apply all but last).
    out_h = intermediate_model_forward(adj, x, params, hidden_layer=True,
                                       compute_dtype=jnp.float32)
    out_h = jax.block_until_ready(out_h)
    ref_h = reference_forward(adj, x, params, hidden_layer=True)
    assert out_h.shape == (N, HID2)
    assert jnp.allclose(out_h, ref_h, atol=1e-4, rtol=1e-4), "hidden-path mismatch"

    # Default bf16 MXU-operand path (native on v5e/v6e/v7x MXUs; f32 accumulate/elementwise).
    out_bf = intermediate_model_forward(adj, x, params, hidden_layer=False)
    out_bf = jax.block_until_ready(out_bf)
    assert out_bf.shape == (N, C)
    assert jnp.allclose(out_bf, ref, atol=5e-2, rtol=5e-2), "bf16-path mismatch"

    print("KERNEL_OK")
</pallas_src>

<mosaic_0001>
module attributes {stable_mosaic.version = 11 : i64} {
  func.func @_gnn_fused_kernel(%arg0: i32, %arg1: i32, %arg2: memref<16x128xf32, #tpu.memory_space<vmem>>, %arg3: memref<128x128xf32, #tpu.memory_space<vmem>>, %arg4: memref<1x128xf32, #tpu.memory_space<vmem>>, %arg5: memref<128x128xf32, #tpu.memory_space<vmem>>, %arg6: memref<1x128xf32, #tpu.memory_space<vmem>>, %arg7: memref<16x128xf32, #tpu.memory_space<vmem>>, %arg8: memref<16x128xf32, #tpu.memory_space<vmem>>) attributes {dimension_semantics = [#tpu.dimension_semantics<parallel>, #tpu.dimension_semantics<arbitrary>], iteration_bounds = array<i64: 1, 1>, scalar_prefetch = 0 : i64, scratch_operands = 1 : i64, tpu.core_type = #tpu.core_type<tc>, window_params = [{transform_indices = @transform_0, window_bounds = array<i64: 16, 128>}, {transform_indices = @transform_1, window_bounds = array<i64: 128, 128>}, {pipeline_mode = #tpu.pipeline_mode<synchronous>, transform_indices = @transform_2, window_bounds = array<i64: 1, 128>}, {pipeline_mode = #tpu.pipeline_mode<synchronous>, transform_indices = @transform_3, window_bounds = array<i64: 128, 128>}, {pipeline_mode = #tpu.pipeline_mode<synchronous>, transform_indices = @transform_4, window_bounds = array<i64: 1, 128>}, {transform_indices = @transform_5, window_bounds = array<i64: 16, 128>}]} {
    %c0_i32 = arith.constant 0 : i32
    %0 = arith.cmpi eq, %arg1, %c0_i32 : i32
    %1 = arith.extui %0 : i1 to i32
    %c0_i32_0 = arith.constant 0 : i32
    %2 = arith.cmpi ne, %1, %c0_i32_0 : i32
    scf.if %2 {
      %cst_10 = arith.constant 0.000000e+00 : f32
      %12 = vector.broadcast %cst_10 : f32 to vector<16x128xf32>
      %c0_11 = arith.constant 0 : index
      %c0_12 = arith.constant 0 : index
      %13 = vector.load %arg8[%c0_11, %c0_12] : memref<16x128xf32, #tpu.memory_space<vmem>>, vector<16x128xf32>
      tpu.vector_store %arg8[%c0_11, %c0_12], %12 {strides = array<i32>} : memref<16x128xf32, #tpu.memory_space<vmem>>, vector<16x128xf32>,
    } else {
    }
    %c0 = arith.constant 0 : index
    %c0_1 = arith.constant 0 : index
    %3 = vector.load %arg8[%c0, %c0_1] : memref<16x128xf32, #tpu.memory_space<vmem>>, vector<16x128xf32>
    %c0_2 = arith.constant 0 : index
    %c0_3 = arith.constant 0 : index
    %4 = vector.load %arg2[%c0_2, %c0_3] : memref<16x128xf32, #tpu.memory_space<vmem>>, vector<16x128xf32>
    %c0_4 = arith.constant 0 : index
    %c0_5 = arith.constant 0 : index
    %5 = vector.load %arg3[%c0_4, %c0_5] : memref<128x128xf32, #tpu.memory_space<vmem>>, vector<128x128xf32>
    %cst = arith.constant dense<0.000000e+00> : vector<16x128xf32>
    %6 = tpu.matmul %4, %5, %cst {dimension_numbers = #tpu.dot_dimension_numbers<[1], [0], [0], [1], [0, 0, 1, 1], [], []>} : vector<16x128xf32>, vector<128x128xf32>, vector<16x128xf32> -> vector<16x128xf32>
    %7 = arith.addf %3, %6 : vector<16x128xf32>
    %c0_6 = arith.constant 0 : index
    %c0_7 = arith.constant 0 : index
    %8 = vector.load %arg8[%c0_6, %c0_7] : memref<16x128xf32, #tpu.memory_space<vmem>>, vector<16x128xf32>
    tpu.vector_store %arg8[%c0_6, %c0_7], %7 {strides = array<i32>} : memref<16x128xf32, #tpu.memory_space<vmem>>, vector<16x128xf32>,
    %c0_i32_8 = arith.constant 0 : i32
    %9 = arith.cmpi eq, %arg1, %c0_i32_8 : i32
    %10 = arith.extui %9 : i1 to i32
    %c0_i32_9 = arith.constant 0 : i32
    %11 = arith.cmpi ne, %10, %c0_i32_9 : i32
    scf.if %11 {
      %c0_10 = arith.constant 0 : index
      %c0_11 = arith.constant 0 : index
      %12 = vector.load %arg8[%c0_10, %c0_11] : memref<16x128xf32, #tpu.memory_space<vmem>>, vector<16x128xf32>
      %c0_12 = arith.constant 0 : index
      %c0_13 = arith.constant 0 : index
      %13 = vector.load %arg4[%c0_12, %c0_13] : memref<1x128xf32, #tpu.memory_space<vmem>>, vector<1x128xf32>
      %14 = vector.broadcast %13 : vector<1x128xf32> to vector<16x128xf32>
      %15 = arith.addf %12, %14 : vector<16x128xf32>
      %cst_14 = arith.constant 0.000000e+00 : f32
      %16 = vector.broadcast %cst_14 : f32 to vector<16x128xf32>
      %17 = arith.maximumf %15, %16 : vector<16x128xf32>
      %c0_15 = arith.constant 0 : index
      %c0_16 = arith.constant 0 : index
      %18 = vector.load %arg5[%c0_15, %c0_16] : memref<128x128xf32, #tpu.memory_space<vmem>>, vector<128x128xf32>
      %cst_17 = arith.constant dense<0.000000e+00> : vector<16x128xf32>
      %19 = tpu.matmul %17, %18, %cst_17 {dimension_numbers = #tpu.dot_dimension_numbers<[1], [0], [0], [1], [0, 0, 1, 1], [], []>} : vector<16x128xf32>, vector<128x128xf32>, vector<16x128xf32> -> vector<16x128xf32>
      %c0_18 = arith.constant 0 : index
      %c0_19 = arith.constant 0 : index
      %20 = vector.load %arg6[%c0_18, %c0_19] : memref<1x128xf32, #tpu.memory_space<vmem>>, vector<1x128xf32>
      %21 = vector.broadcast %20 : vector<1x128xf32> to vector<16x128xf32>
      %22 = arith.addf %19, %21 : vector<16x128xf32>
      %c0_20 = arith.constant 0 : index
      %c0_21 = arith.constant 0 : index
      %23 = vector.load %arg7[%c0_20, %c0_21] : memref<16x128xf32, #tpu.memory_space<vmem>>, vector<16x128xf32>
      tpu.vector_store %arg7[%c0_20, %c0_21], %22 {strides = array<i32>} : memref<16x128xf32, #tpu.memory_space<vmem>>, vector<16x128xf32>,
    } else {
    }
    return
  }
  func.func @transform_0(%arg0: i32, %arg1: i32) -> (i32, i32) {
    %c0_i32 = arith.constant 0 : i32
    return %arg0, %arg1 : i32, i32
  }
  func.func @transform_1(%arg0: i32, %arg1: i32) -> (i32, i32) {
    %c0_i32 = arith.constant 0 : i32
    %c0_i32_0 = arith.constant 0 : i32
    return %arg1, %c0_i32 : i32, i32
  }
  func.func @transform_2(%arg0: i32, %arg1: i32) -> (i32, i32) {
    %c0_i32 = arith.constant 0 : i32
    %c0_i32_0 = arith.constant 0 : i32
    %c0_i32_1 = arith.constant 0 : i32
    return %c0_i32, %c0_i32_0 : i32, i32
  }
  func.func @transform_3(%arg0: i32, %arg1: i32) -> (i32, i32) {
    %c0_i32 = arith.constant 0 : i32
    %c0_i32_0 = arith.constant 0 : i32
    %c0_i32_1 = arith.constant 0 : i32
    return %c0_i32, %c0_i32_0 : i32, i32
  }
  func.func @transform_4(%arg0: i32, %arg1: i32) -> (i32, i32) {
    %c0_i32 = arith.constant 0 : i32
    %c0_i32_0 = arith.constant 0 : i32
    %c0_i32_1 = arith.constant 0 : i32
    return %c0_i32, %c0_i32_0 : i32, i32
  }
  func.func @transform_5(%arg0: i32, %arg1: i32) -> (i32, i32) {
    %c0_i32 = arith.constant 0 : i32
    %c0_i32_0 = arith.constant 0 : i32
    return %arg0, %c0_i32 : i32, i32
  }
}

module attributes {stable_mosaic.version = 11 : i64} {
  func.func @_gnn_fused_kernel(%arg0: i32, %arg1: i32, %arg2: memref<16x128xf32, #tpu.memory_space<vmem>>, %arg3: memref<128x128xf32, #tpu.memory_space<vmem>>, %arg4: memref<1x128xf32, #tpu.memory_space<vmem>>, %arg5: memref<128x128xf32, #tpu.memory_space<vmem>>, %arg6: memref<1x128xf32, #tpu.memory_space<vmem>>, %arg7: memref<16x128xf32, #tpu.memory_space<vmem>>, %arg8: memref<16x128xf32, #tpu.memory_space<vmem>>) attributes {dimension_semantics = [#tpu.dimension_semantics<parallel>, #tpu.dimension_semantics<arbitrary>], iteration_bounds = array<i64: 1, 1>, scalar_prefetch = 0 : i64, scratch_operands = 1 : i64, tpu.core_type = #tpu.core_type<tc>, window_params = [{transform_indices = @transform_0, window_bounds = array<i64: 16, 128>}, {transform_indices = @transform_1, window_bounds = array<i64: 128, 128>}, {pipeline_mode = #tpu.pipeline_mode<synchronous>, transform_indices = @transform_2, window_bounds = array<i64: 1, 128>}, {pipeline_mode = #tpu.pipeline_mode<synchronous>, transform_indices = @transform_3, window_bounds = array<i64: 128, 128>}, {pipeline_mode = #tpu.pipeline_mode<synchronous>, transform_indices = @transform_4, window_bounds = array<i64: 1, 128>}, {transform_indices = @transform_5, window_bounds = array<i64: 16, 128>}]} {
    %c0_i32 = arith.constant 0 : i32
    %0 = arith.cmpi eq, %arg1, %c0_i32 : i32
    %1 = arith.extui %0 : i1 to i32
    %c0_i32_0 = arith.constant 0 : i32
    %2 = arith.cmpi ne, %1, %c0_i32_0 : i32
    scf.if %2 {
      %cst_10 = arith.constant 0.000000e+00 : f32
      %12 = vector.broadcast %cst_10 : f32 to vector<16x128xf32>
      %c0_11 = arith.constant 0 : index
      %c0_12 = arith.constant 0 : index
      %13 = vector.load %arg8[%c0_11, %c0_12] : memref<16x128xf32, #tpu.memory_space<vmem>>, vector<16x128xf32>
      tpu.vector_store %arg8[%c0_11, %c0_12], %12 {strides = array<i32>} : memref<16x128xf32, #tpu.memory_space<vmem>>, vector<16x128xf32>,
    } else {
    }
    %c0 = arith.constant 0 : index
    %c0_1 = arith.constant 0 : index
    %3 = vector.load %arg8[%c0, %c0_1] : memref<16x128xf32, #tpu.memory_space<vmem>>, vector<16x128xf32>
    %c0_2 = arith.constant 0 : index
    %c0_3 = arith.constant 0 : index
    %4 = vector.load %arg2[%c0_2, %c0_3] : memref<16x128xf32, #tpu.memory_space<vmem>>, vector<16x128xf32>
    %c0_4 = arith.constant 0 : index
    %c0_5 = arith.constant 0 : index
    %5 = vector.load %arg3[%c0_4, %c0_5] : memref<128x128xf32, #tpu.memory_space<vmem>>, vector<128x128xf32>
    %cst = arith.constant dense<0.000000e+00> : vector<16x128xf32>
    %6 = tpu.matmul %4, %5, %cst {dimension_numbers = #tpu.dot_dimension_numbers<[1], [0], [0], [1], [0, 0, 1, 1], [], []>} : vector<16x128xf32>, vector<128x128xf32>, vector<16x128xf32> -> vector<16x128xf32>
    %7 = arith.addf %3, %6 : vector<16x128xf32>
    %c0_6 = arith.constant 0 : index
    %c0_7 = arith.constant 0 : index
    %8 = vector.load %arg8[%c0_6, %c0_7] : memref<16x128xf32, #tpu.memory_space<vmem>>, vector<16x128xf32>
    tpu.vector_store %arg8[%c0_6, %c0_7], %7 {strides = array<i32>} : memref<16x128xf32, #tpu.memory_space<vmem>>, vector<16x128xf32>,
    %c0_i32_8 = arith.constant 0 : i32
    %9 = arith.cmpi eq, %arg1, %c0_i32_8 : i32
    %10 = arith.extui %9 : i1 to i32
    %c0_i32_9 = arith.constant 0 : i32
    %11 = arith.cmpi ne, %10, %c0_i32_9 : i32
    scf.if %11 {
      %c0_10 = arith.constant 0 : index
      %c0_11 = arith.constant 0 : index
      %12 = vector.load %arg8[%c0_10, %c0_11] : memref<16x128xf32, #tpu.memory_space<vmem>>, vector<16x128xf32>
      %c0_12 = arith.constant 0 : index
      %c0_13 = arith.constant 0 : index
      %13 = vector.load %arg4[%c0_12, %c0_13] : memref<1x128xf32, #tpu.memory_space<vmem>>, vector<1x128xf32>
      %14 = vector.broadcast %13 : vector<1x128xf32> to vector<16x128xf32>
      %15 = arith.addf %12, %14 : vector<16x128xf32>
      %cst_14 = arith.constant 0.000000e+00 : f32
      %16 = vector.broadcast %cst_14 : f32 to vector<16x128xf32>
      %17 = arith.maximumf %15, %16 : vector<16x128xf32>
      %c0_15 = arith.constant 0 : index
      %c0_16 = arith.constant 0 : index
      %18 = vector.load %arg5[%c0_15, %c0_16] : memref<128x128xf32, #tpu.memory_space<vmem>>, vector<128x128xf32>
      %cst_17 = arith.constant dense<0.000000e+00> : vector<16x128xf32>
      %19 = tpu.matmul %17, %18, %cst_17 {dimension_numbers = #tpu.dot_dimension_numbers<[1], [0], [0], [1], [0, 0, 1, 1], [], []>} : vector<16x128xf32>, vector<128x128xf32>, vector<16x128xf32> -> vector<16x128xf32>
      %c0_18 = arith.constant 0 : index
      %c0_19 = arith.constant 0 : index
      %20 = vector.load %arg6[%c0_18, %c0_19] : memref<1x128xf32, #tpu.memory_space<vmem>>, vector<1x128xf32>
      %21 = vector.broadcast %20 : vector<1x128xf32> to vector<16x128xf32>
      %22 = arith.addf %19, %21 : vector<16x128xf32>
      %c0_20 = arith.constant 0 : index
      %c0_21 = arith.constant 0 : index
      %23 = vector.load %arg7[%c0_20, %c0_21] : memref<16x128xf32, #tpu.memory_space<vmem>>, vector<16x128xf32>
      tpu.vector_store %arg7[%c0_20, %c0_21], %22 {strides = array<i32>} : memref<16x128xf32, #tpu.memory_space<vmem>>, vector<16x128xf32>,
    } else {
    }
    return
  }
  func.func @transform_0(%arg0: i32, %arg1: i32) -> (i32, i32) {
    %c0_i32 = arith.constant 0 : i32
    return %arg0, %arg1 : i32, i32
  }
  func.func @transform_1(%arg0: i32, %arg1: i32) -> (i32, i32) {
    %c0_i32 = arith.constant 0 : i32
    %c0_i32_0 = arith.constant 0 : i32
    return %arg1, %c0_i32 : i32, i32
  }
  func.func @transform_2(%arg0: i32, %arg1: i32) -> (i32, i32) {
    %c0_i32 = arith.constant 0 : i32
    %c0_i32_0 = arith.constant 0 : i32
    %c0_i32_1 = arith.constant 0 : i32
    return %c0_i32, %c0_i32_0 : i32, i32
  }
  func.func @transform_3(%arg0: i32, %arg1: i32) -> (i32, i32) {
    %c0_i32 = arith.constant 0 : i32
    %c0_i32_0 = arith.constant 0 : i32
    %c0_i32_1 = arith.constant 0 : i32
    return %c0_i32, %c0_i32_0 : i32, i32
  }
  func.func @transform_4(%arg0: i32, %arg1: i32) -> (i32, i32) {
    %c0_i32 = arith.constant 0 : i32
    %c0_i32_0 = arith.constant 0 : i32
    %c0_i32_1 = arith.constant 0 : i32
    return %c0_i32, %c0_i32_0 : i32, i32
  }
  func.func @transform_5(%arg0: i32, %arg1: i32) -> (i32, i32) {
    %c0_i32 = arith.constant 0 : i32
    %c0_i32_0 = arith.constant 0 : i32
    return %arg0, %c0_i32 : i32, i32
  }
}

</mosaic_0001>

<llo_original>
// kernel: tpu_custom_call.1
$region0: #{tpu_custom_call.1}
  #allocation0 [shape = 'u32[]', space=smem, size = 0x4, offset = 0x4, fixed_abs, tag = 'smem constant byte address 0x4 - core index']
  #allocation1 [shape = 'u32[144,128]{1,0:T(1,128)}', space=vmem, size = 0x12000, scoped, tag = 'internal scratch']
  #allocation2 [shape = 'f32[16,128]{1,0:T(8,128)}', space=vmem, size = 0x2000, scoped, tag = 'scratch operand']
  %s0 = inlined_call_operand.hbm [shape: f32[16,128], index: 0, kind: input, shape index: {}]
  %s1 = inlined_call_operand.hbm [shape: f32[128,128], index: 1, kind: input, shape index: {}]
  %s2 = inlined_call_operand.vmem [shape: f32[1,128], index: 2, kind: input, shape index: {}]
  %s3 = inlined_call_operand.hbm [shape: f32[128,128], index: 3, kind: input, shape index: {}]
  %s4 = inlined_call_operand.vmem [shape: f32[1,128], index: 4, kind: input, shape index: {}]
  %s5 = inlined_call_operand.hbm [shape: f32[16,128], index: 5, kind: output, shape index: {}]
  %s6 = sld [smem:[#allocation0]]
  $region50: #{tpu_custom_call.1} parent=0
    _
  %s8 = ssub.s32 1, %s6
  %s9 = scalar_select 0, %s8, %s6
  $region1: #{tpu_custom_call.1} parent=0
    #allocation3 [shape = 'u8[8192]{0}', space=vmem, size = 0x2000, scoped, tag = 'input window, operand 0, single buffered']
    #allocation4 [shape = 's32[1]{0}', space=sflag, size = 0x4, scoped, tag = 'scoped memory for tpu_custom_call.1']
    #allocation5 [shape = 's32[1]{0}', space=sflag, size = 0x4, scoped, tag = 'scoped memory for tpu_custom_call.1']
    #allocation6 [shape = 'u8[65536]{0}', space=vmem, size = 0x10000, scoped, tag = 'input window, operand 1, single buffered']
    #allocation7 [shape = 's32[1]{0}', space=sflag, size = 0x4, scoped, tag = 'scoped memory for tpu_custom_call.1']
    #allocation8 [shape = 'u8[65536]{0}', space=vmem, size = 0x10000, scoped, tag = 'input window, operand 3, single buffered']
    #allocation9 [shape = 'u8[8192]{0}', space=vmem, size = 0x2000, scoped, tag = 'output window, operand 0, single buffered']
    %10 = vsyncpa [#allocation4], 0
    %11 = vsyncpa [#allocation7], 0
    %12 = vsyncpa [#allocation5], 0
    // Predicated region
    $region2: #{tpu_custom_call.1} parent=1 // pred_check
      _
    $region3: #{tpu_custom_call.1} parent=1 // pred_check_branch
      %14 = sbr.rel (0) target = $region5
    $region4: #{tpu_custom_call.1} parent=1 // pred_region
      %s16 = ssub.s32 256, 256
      %17 = vsyncadd [#allocation4], %s16
      %s18 = sshll.u32 [#allocation3], 4
      %s19 = int_to_ptr.vmem [resolvable:$true] %s18
      %24 = dma.hbm_to_vmem [thread:$0]  %s0, 256, %s19, [#allocation4], 128, 128, 8
    $region5: #{tpu_custom_call.1} parent=1 // pred_fallthru
      _
    // Predicated region
    $region6: #{tpu_custom_call.1} parent=1 // pred_check
      _
    $region7: #{tpu_custom_call.1} parent=1 // pred_check_branch
      %26 = sbr.rel (0) target = $region9
    $region8: #{tpu_custom_call.1} parent=1 // pred_region
      %s28 = ssub.s32 2048, 2048
      %29 = vsyncadd [#allocation7], %s28
      %s30 = sshll.u32 [#allocation6], 4
      %s31 = int_to_ptr.vmem [resolvable:$true] %s30
      %36 = dma.hbm_to_vmem [thread:$0]  %s1, 2048, %s31, [#allocation7], 128, 128, 8
    $region9: #{tpu_custom_call.1} parent=1 // pred_fallthru
      _
    // Predicated region
    $region10: #{tpu_custom_call.1} parent=1 // pred_check
      _
    $region11: #{tpu_custom_call.1} parent=1 // pred_check_branch
      %38 = sbr.rel (0) target = $region13
    $region12: #{tpu_custom_call.1} parent=1 // pred_region
      _
    $region13: #{tpu_custom_call.1} parent=1 // pred_fallthru
      _
    // Predicated region
    $region14: #{tpu_custom_call.1} parent=1 // pred_check
      _
    $region15: #{tpu_custom_call.1} parent=1 // pred_check_branch
      %40 = sbr.rel (0) target = $region17
    $region16: #{tpu_custom_call.1} parent=1 // pred_region
      %s42 = ssub.s32 2048, 2048
      %43 = vsyncadd [#allocation7], %s42
      %s44 = sshll.u32 [#allocation8], 4
      %s45 = int_to_ptr.vmem [resolvable:$true] %s44
      %50 = dma.hbm_to_vmem [thread:$0]  %s3, 2048, %s45, [#allocation7], 128, 128, 8
    $region17: #{tpu_custom_call.1} parent=1 // pred_fallthru
      _
    // Predicated region
    $region18: #{tpu_custom_call.1} parent=1 // pred_check
      _
    $region19: #{tpu_custom_call.1} parent=1 // pred_check_branch
      %52 = sbr.rel (0) target = $region21
    $region20: #{tpu_custom_call.1} parent=1 // pred_region
      _
    $region21: #{tpu_custom_call.1} parent=1 // pred_fallthru
      _
    // Predicated region
    $region22: #{tpu_custom_call.1} parent=1 // pred_check
      _
    $region23: #{tpu_custom_call.1} parent=1 // pred_check_branch
      %54 = sbr.rel (0) target = $region25
    $region24: #{tpu_custom_call.1} parent=1 // pred_region
      %55 = dma.done [#allocation4], 256
    $region25: #{tpu_custom_call.1} parent=1 // pred_fallthru
      _
    // Predicated region
    $region26: #{tpu_custom_call.1} parent=1 // pred_check
      _
    $region27: #{tpu_custom_call.1} parent=1 // pred_check_branch
      %57 = sbr.rel (0) target = $region29
    $region28: #{tpu_custom_call.1} parent=1 // pred_region
      %58 = dma.done [#allocation7], 2048
    $region29: #{tpu_custom_call.1} parent=1 // pred_fallthru
      _
    // Predicated region
    $region30: #{tpu_custom_call.1} parent=1 // pred_check
      _
    $region31: #{tpu_custom_call.1} parent=1 // pred_check_branch
      %60 = sbr.rel (0) target = $region33
    $region32: #{tpu_custom_call.1} parent=1 // pred_region
      %61 = dma.done [#allocation7], 2048
    $region33: #{tpu_custom_call.1} parent=1 // pred_fallthru
      _
    %p62 = scmp.eq.s32.totalorder 0, 0
    // Predicated region
    $region34: #{tpu_custom_call.1} parent=1 // pred_check
      %p63 = pneg %p62
    $region35: #{tpu_custom_call.1} parent=1 // pred_check_branch
      %65 = sbr.rel (%p63) target = $region37
    $region36: #{tpu_custom_call.1} parent=1 // pred_region
      %66 = vst [vmem:[#allocation2] sm:$0xff] 0.0
      %67 = vst [vmem:[#allocation2 + $0x8] sm:$0xff] 0.0
    $region37: #{tpu_custom_call.1} parent=1 // pred_fallthru
      _
    %v68 = vld [vmem:[#allocation2] sm:$0xff]
    %v69 = vld [vmem:[#allocation2 + $0x8] sm:$0xff]
    %v70 = vld [vmem:[#allocation3] sm:$0xff]
    %v71 = vld [vmem:[#allocation3 + $0x8] sm:$0xff]
    %v72 = vld [vmem:[#allocation6] sm:$0xff]
    %v73 = vld [vmem:[#allocation6 + $0x8] sm:$0xff]
    %v74 = vld [vmem:[#allocation6 + $0x10] sm:$0xff]
    %v75 = vld [vmem:[#allocation6 + $0x18] sm:$0xff]
    %v76 = vld [vmem:[#allocation6 + $0x20] sm:$0xff]
    %v77 = vld [vmem:[#allocation6 + $0x28] sm:$0xff]
    %v78 = vld [vmem:[#allocation6 + $0x30] sm:$0xff]
    %v79 = vld [vmem:[#allocation6 + $0x38] sm:$0xff]
    %v80 = vld [vmem:[#allocation6 + $0x40] sm:$0xff]
    %v81 = vld [vmem:[#allocation6 + $0x48] sm:$0xff]
    %v82 = vld [vmem:[#allocation6 + $0x50] sm:$0xff]
    %v83 = vld [vmem:[#allocation6 + $0x58] sm:$0xff]
    %v84 = vld [vmem:[#allocation6 + $0x60] sm:$0xff]
    %v85 = vld [vmem:[#allocation6 + $0x68] sm:$0xff]
    %v86 = vld [vmem:[#allocation6 + $0x70] sm:$0xff]
    %v87 = vld [vmem:[#allocation6 + $0x78] sm:$0xff]
    %88 = vmatprep.subr.mxu0 0.0
    %89 = vmatpush1.msra.mxu0 %v87
    %90 = vmatprep.subr.mxu0 0.0
    %91 = vmatpush1.msra.mxu0 %v86
    %92 = vmatprep.subr.mxu0 0.0
    %93 = vmatpush1.msra.mxu0 %v85
    %94 = vmatprep.subr.mxu0 0.0
    %95 = vmatpush1.msra.mxu0 %v84
    %96 = vmatprep.subr.mxu0 0.0
    %97 = vmatpush1.msra.mxu0 %v83
    %98 = vmatprep.subr.mxu0 0.0
    %99 = vmatpush1.msra.mxu0 %v82
    %100 = vmatprep.subr.mxu0 0.0
    %101 = vmatpush1.msra.mxu0 %v81
    %102 = vmatprep.subr.mxu0 0.0
    %103 = vmatpush1.msra.mxu0 %v80
    %104 = vmatprep.subr.mxu0 0.0
    %105 = vmatpush1.msra.mxu0 %v79
    %106 = vmatprep.subr.mxu0 0.0
    %107 = vmatpush1.msra.mxu0 %v78
    %108 = vmatprep.subr.mxu0 0.0
    %109 = vmatpush1.msra.mxu0 %v77
    %110 = vmatprep.subr.mxu0 0.0
    %111 = vmatpush1.msra.mxu0 %v76
    %112 = vmatprep.subr.mxu0 0.0
    %113 = vmatpush1.msra.mxu0 %v75
    %114 = vmatprep.subr.mxu0 0.0
    %115 = vmatpush1.msra.mxu0 %v74
    %116 = vmatprep.subr.mxu0 0.0
    %117 = vmatpush1.msra.mxu0 %v73
    %118 = vmatprep.subr.mxu0 0.0
    %119 = vmatpush1.msra.mxu0 %v72
    %120 = vmatprep.subr.mxu0 0.0
    %121 = vmatpush2.msra.mxu0 0.0
    %122 = vmatprep.subr.mxu0 0.0
    %123 = vmatpush2.msra.mxu0 0.0
    %124 = vmatprep.subr.mxu0 0.0
    %125 = vmatpush2.msra.mxu0 0.0
    %126 = vmatprep.subr.mxu0 0.0
    %127 = vmatpush2.msra.mxu0 0.0
    %128 = vmatprep.subr.mxu0 0.0
    %129 = vmatpush2.msra.mxu0 0.0
    %130 = vmatprep.subr.mxu0 0.0
    %131 = vmatpush2.msra.mxu0 0.0
    %132 = vmatprep.subr.mxu0 0.0
    %133 = vmatpush2.msra.mxu0 0.0
    %134 = vmatprep.subr.mxu0 0.0
    %135 = vmatpush2.msra.mxu0 0.0
    %136 = vmatprep.subr.mxu0 0.0
    %137 = vmatpush2.msra.mxu0 0.0
    %138 = vmatprep.subr.mxu0 0.0
    %139 = vmatpush2.msra.mxu0 0.0
    %140 = vmatprep.subr.mxu0 0.0
    %141 = vmatpush2.msra.mxu0 0.0
    %142 = vmatprep.subr.mxu0 0.0
    %143 = vmatpush2.msra.mxu0 0.0
    %144 = vmatprep.subr.mxu0 0.0
    %145 = vmatpush2.msra.mxu0 0.0
    %146 = vmatprep.subr.mxu0 0.0
    %147 = vmatpush2.msra.mxu0 0.0
    %148 = vmatprep.subr.mxu0 0.0
    %149 = vmatpush2.msra.mxu0 0.0
    %150 = vmatprep.subr.mxu0 0.0
    %151 = vmatpush2.msra.mxu0 0.0
    %152 = vmatprep.mubr.f32.mxu0 0.0
    %153 = vmatmul.mubr.f32.gmra.mxu0 %v70
    %v154 = vpop.f32.mrf.mxu0
    %v155 = vadd.f32 0.0, %v154
    %v156 = vpop.f32.mrf.mxu0
    %157 = vmatprep.mubr.f32.mxu0 0.0
    %158 = vmatmul.mubr.f32.gmra.mxu0 %v71
    %v159 = vpop.f32.mrf.mxu0
    %v160 = vadd.f32 0.0, %v159
    %v161 = vpop.f32.mrf.mxu0
    %162 = vdwg.mxu0
    %v163 = vadd.f32 %v68, %v155
    %v164 = vadd.f32 %v69, %v160
    %165 = vst [vmem:[#allocation2] sm:$0xff] %v163
    %166 = vst [vmem:[#allocation2 + $0x8] sm:$0xff] %v164
    // Predicated region
    $region38: #{tpu_custom_call.1} parent=1 // pred_check
      %p167 = pneg %p62
    $region39: #{tpu_custom_call.1} parent=1 // pred_check_branch
      %169 = sbr.rel (%p167) target = $region41
    $region40: #{tpu_custom_call.1} parent=1 // pred_region
      %v170 = vld [vmem:[#allocation2] sm:$0xff]
      %v171 = vld [vmem:[#allocation2 + $0x8] sm:$0xff]
      %v172 = vld [vmem:[%s2] sm:$0x1]
      %v174 = vlaneseq
      %v175 = vshrl.u32 %v174, 7
      %v176 = vsub.s32 0, %v175
      %v177 = vrot.slane %v172, %v176
      %v179 = vadd.f32 %v170, %v177
      %v180 = vadd.f32 %v171, %v177
      %v181 = vmax.f32 %v179, 0.0
      %v182 = vmax.f32 %v180, 0.0
      %v183 = vld [vmem:[#allocation8] sm:$0xff]
      %v184 = vld [vmem:[#allocation8 + $0x8] sm:$0xff]
      %v185 = vld [vmem:[#allocation8 + $0x10] sm:$0xff]
      %v186 = vld [vmem:[#allocation8 + $0x18] sm:$0xff]
      %v187 = vld [vmem:[#allocation8 + $0x20] sm:$0xff]
      %v188 = vld [vmem:[#allocation8 + $0x28] sm:$0xff]
      %v189 = vld [vmem:[#allocation8 + $0x30] sm:$0xff]
      %v190 = vld [vmem:[#allocation8 + $0x38] sm:$0xff]
      %v191 = vld [vmem:[#allocation8 + $0x40] sm:$0xff]
      %v192 = vld [vmem:[#allocation8 + $0x48] sm:$0xff]
      %v193 = vld [vmem:[#allocation8 + $0x50] sm:$0xff]
      %v194 = vld [vmem:[#allocation8 + $0x58] sm:$0xff]
      %v195 = vld [vmem:[#allocation8 + $0x60] sm:$0xff]
      %v196 = vld [vmem:[#allocation8 + $0x68] sm:$0xff]
      %v197 = vld [vmem:[#allocation8 + $0x70] sm:$0xff]
      %v198 = vld [vmem:[#allocation8 + $0x78] sm:$0xff]
      %v199 = vld [vmem:[%s4] sm:$0x1]
      %v201 = vlaneseq
      %v202 = vshrl.u32 %v201, 7
      %v203 = vsub.s32 0, %v202
      %v204 = vrot.slane %v199, %v203
      %206 = vmatprep.subr.mxu0 0.0
      %207 = vmatpush1.msra.mxu0 %v198
      %208 = vmatprep.subr.mxu0 0.0
      %209 = vmatpush1.msra.mxu0 %v197
      %210 = vmatprep.subr.mxu0 0.0
      %211 = vmatpush1.msra.mxu0 %v196
      %212 = vmatprep.subr.mxu0 0.0
      %213 = vmatpush1.msra.mxu0 %v195
      %214 = vmatprep.subr.mxu0 0.0
      %215 = vmatpush1.msra.mxu0 %v194
      %216 = vmatprep.subr.mxu0 0.0
      %217 = vmatpush1.msra.mxu0 %v193
      %218 = vmatprep.subr.mxu0 0.0
      %219 = vmatpush1.msra.mxu0 %v192
      %220 = vmatprep.subr.mxu0 0.0
      %221 = vmatpush1.msra.mxu0 %v191
      %222 = vmatprep.subr.mxu0 0.0
      %223 = vmatpush1.msra.mxu0 %v190
      %224 = vmatprep.subr.mxu0 0.0
      %225 = vmatpush1.msra.mxu0 %v189
      %226 = vmatprep.subr.mxu0 0.0
      %227 = vmatpush1.msra.mxu0 %v188
      %228 = vmatprep.subr.mxu0 0.0
      %229 = vmatpush1.msra.mxu0 %v187
      %230 = vmatprep.subr.mxu0 0.0
      %231 = vmatpush1.msra.mxu0 %v186
      %232 = vmatprep.subr.mxu0 0.0
      %233 = vmatpush1.msra.mxu0 %v185
      %234 = vmatprep.subr.mxu0 0.0
      %235 = vmatpush1.msra.mxu0 %v184
      %236 = vmatprep.subr.mxu0 0.0
      %237 = vmatpush1.msra.mxu0 %v183
      %238 = vmatprep.subr.mxu0 0.0
      %239 = vmatpush2.msra.mxu0 0.0
      %240 = vmatprep.subr.mxu0 0.0
      %241 = vmatpush2.msra.mxu0 0.0
      %242 = vmatprep.subr.mxu0 0.0
      %243 = vmatpush2.msra.mxu0 0.0
      %244 = vmatprep.subr.mxu0 0.0
      %245 = vmatpush2.msra.mxu0 0.0
      %246 = vmatprep.subr.mxu0 0.0
      %247 = vmatpush2.msra.mxu0 0.0
      %248 = vmatprep.subr.mxu0 0.0
      %249 = vmatpush2.msra.mxu0 0.0
      %250 = vmatprep.subr.mxu0 0.0
      %251 = vmatpush2.msra.mxu0 0.0
      %252 = vmatprep.subr.mxu0 0.0
      %253 = vmatpush2.msra.mxu0 0.0
      %254 = vmatprep.subr.mxu0 0.0
      %255 = vmatpush2.msra.mxu0 0.0
      %256 = vmatprep.subr.mxu0 0.0
      %257 = vmatpush2.msra.mxu0 0.0
      %258 = vmatprep.subr.mxu0 0.0
      %259 = vmatpush2.msra.mxu0 0.0
      %260 = vmatprep.subr.mxu0 0.0
      %261 = vmatpush2.msra.mxu0 0.0
      %262 = vmatprep.subr.mxu0 0.0
      %263 = vmatpush2.msra.mxu0 0.0
      %264 = vmatprep.subr.mxu0 0.0
      %265 = vmatpush2.msra.mxu0 0.0
      %266 = vmatprep.subr.mxu0 0.0
      %267 = vmatpush2.msra.mxu0 0.0
      %268 = vmatprep.subr.mxu0 0.0
      %269 = vmatpush2.msra.mxu0 0.0
      %270 = vmatprep.mubr.f32.mxu0 0.0
      %271 = vmatmul.mubr.f32.gmra.mxu0 %v181
      %v272 = vpop.f32.mrf.mxu0
      %v273 = vadd.f32 %v204, %v272
      %v274 = vpop.f32.mrf.mxu0
      %275 = vmatprep.mubr.f32.mxu0 0.0
      %276 = vmatmul.mubr.f32.gmra.mxu0 %v182
      %v277 = vpop.f32.mrf.mxu0
      %v278 = vadd.f32 %v204, %v277
      %v279 = vpop.f32.mrf.mxu0
      %280 = vdwg.mxu0
      %281 = vst [vmem:[#allocation9] sm:$0xff] %v273
      %282 = vst [vmem:[#allocation9 + $0x8] sm:$0xff] %v278
    $region41: #{tpu_custom_call.1} parent=1 // pred_fallthru
      _
    // Predicated region
    $region42: #{tpu_custom_call.1} parent=1 // pred_check
      _
    $region43: #{tpu_custom_call.1} parent=1 // pred_check_branch
      %284 = sbr.rel (0) target = $region45
    $region44: #{tpu_custom_call.1} parent=1 // pred_region
      %s286 = ssub.s32 256, 256
      %287 = vsyncadd [#allocation5], %s286
      %s288 = sshll.u32 [#allocation9], 4
      %s289 = int_to_ptr.vmem [resolvable:$true] %s288
      %294 = dma.vmem_to_hbm [thread:$0]  %s289, 256, %s5, [#allocation5], 128, 128, 8
    $region45: #{tpu_custom_call.1} parent=1 // pred_fallthru
      _
    // Predicated region
    $region46: #{tpu_custom_call.1} parent=1 // pred_check
      _
    $region47: #{tpu_custom_call.1} parent=1 // pred_check_branch
      %296 = sbr.rel (0) target = $region49
    $region48: #{tpu_custom_call.1} parent=1 // pred_region
      %297 = dma.done [#allocation5], 256
    $region49: #{tpu_custom_call.1} parent=1 // pred_fallthru
      _
    %298 = vsyncpa [#allocation4], 1
    %299 = vsyncpa [#allocation7], 1
    %300 = vsyncpa [#allocation5], 1

// kernel: tpu_custom_call.1
$region0: #{tpu_custom_call.1}
  #allocation0 [shape = 'u32[]', space=smem, size = 0x4, offset = 0x4, fixed_abs, tag = 'smem constant byte address 0x4 - core index']
  #allocation1 [shape = 'u32[144,128]{1,0:T(1,128)}', space=vmem, size = 0x12000, scoped, tag = 'internal scratch']
  #allocation2 [shape = 'f32[16,128]{1,0:T(8,128)}', space=vmem, size = 0x2000, scoped, tag = 'scratch operand']
  %s0 = inlined_call_operand.hbm [shape: f32[16,128], index: 0, kind: input, shape index: {}]
  %s1 = inlined_call_operand.hbm [shape: f32[128,128], index: 1, kind: input, shape index: {}]
  %s2 = inlined_call_operand.vmem [shape: f32[1,128], index: 2, kind: input, shape index: {}]
  %s3 = inlined_call_operand.hbm [shape: f32[128,128], index: 3, kind: input, shape index: {}]
  %s4 = inlined_call_operand.vmem [shape: f32[1,128], index: 4, kind: input, shape index: {}]
  %s5 = inlined_call_operand.hbm [shape: f32[16,128], index: 5, kind: output, shape index: {}]
  %s6 = sld [smem:[#allocation0]]
  $region50: #{tpu_custom_call.1} parent=0
    _
  %s8 = ssub.s32 1, %s6
  %s9 = scalar_select 0, %s8, %s6
  $region1: #{tpu_custom_call.1} parent=0
    #allocation3 [shape = 'u8[8192]{0}', space=vmem, size = 0x2000, scoped, tag = 'input window, operand 0, single buffered']
    #allocation4 [shape = 's32[1]{0}', space=sflag, size = 0x4, scoped, tag = 'scoped memory for tpu_custom_call.1']
    #allocation5 [shape = 's32[1]{0}', space=sflag, size = 0x4, scoped, tag = 'scoped memory for tpu_custom_call.1']
    #allocation6 [shape = 'u8[65536]{0}', space=vmem, size = 0x10000, scoped, tag = 'input window, operand 1, single buffered']
    #allocation7 [shape = 's32[1]{0}', space=sflag, size = 0x4, scoped, tag = 'scoped memory for tpu_custom_call.1']
    #allocation8 [shape = 'u8[65536]{0}', space=vmem, size = 0x10000, scoped, tag = 'input window, operand 3, single buffered']
    #allocation9 [shape = 'u8[8192]{0}', space=vmem, size = 0x2000, scoped, tag = 'output window, operand 0, single buffered']
    %10 = vsyncpa [#allocation4], 0
    %11 = vsyncpa [#allocation7], 0
    %12 = vsyncpa [#allocation5], 0
    // Predicated region
    $region2: #{tpu_custom_call.1} parent=1 // pred_check
      _
    $region3: #{tpu_custom_call.1} parent=1 // pred_check_branch
      %14 = sbr.rel (0) target = $region5
    $region4: #{tpu_custom_call.1} parent=1 // pred_region
      %s16 = ssub.s32 256, 256
      %17 = vsyncadd [#allocation4], %s16
      %s18 = sshll.u32 [#allocation3], 4
      %s19 = int_to_ptr.vmem [resolvable:$true] %s18
      %24 = dma.hbm_to_vmem [thread:$0]  %s0, 256, %s19, [#allocation4], 128, 128, 8
    $region5: #{tpu_custom_call.1} parent=1 // pred_fallthru
      _
    // Predicated region
    $region6: #{tpu_custom_call.1} parent=1 // pred_check
      _
    $region7: #{tpu_custom_call.1} parent=1 // pred_check_branch
      %26 = sbr.rel (0) target = $region9
    $region8: #{tpu_custom_call.1} parent=1 // pred_region
      %s28 = ssub.s32 2048, 2048
      %29 = vsyncadd [#allocation7], %s28
      %s30 = sshll.u32 [#allocation6], 4
      %s31 = int_to_ptr.vmem [resolvable:$true] %s30
      %36 = dma.hbm_to_vmem [thread:$0]  %s1, 2048, %s31, [#allocation7], 128, 128, 8
    $region9: #{tpu_custom_call.1} parent=1 // pred_fallthru
      _
    // Predicated region
    $region10: #{tpu_custom_call.1} parent=1 // pred_check
      _
    $region11: #{tpu_custom_call.1} parent=1 // pred_check_branch
      %38 = sbr.rel (0) target = $region13
    $region12: #{tpu_custom_call.1} parent=1 // pred_region
      _
    $region13: #{tpu_custom_call.1} parent=1 // pred_fallthru
      _
    // Predicated region
    $region14: #{tpu_custom_call.1} parent=1 // pred_check
      _
    $region15: #{tpu_custom_call.1} parent=1 // pred_check_branch
      %40 = sbr.rel (0) target = $region17
    $region16: #{tpu_custom_call.1} parent=1 // pred_region
      %s42 = ssub.s32 2048, 2048
      %43 = vsyncadd [#allocation7], %s42
      %s44 = sshll.u32 [#allocation8], 4
      %s45 = int_to_ptr.vmem [resolvable:$true] %s44
      %50 = dma.hbm_to_vmem [thread:$0]  %s3, 2048, %s45, [#allocation7], 128, 128, 8
    $region17: #{tpu_custom_call.1} parent=1 // pred_fallthru
      _
    // Predicated region
    $region18: #{tpu_custom_call.1} parent=1 // pred_check
      _
    $region19: #{tpu_custom_call.1} parent=1 // pred_check_branch
      %52 = sbr.rel (0) target = $region21
    $region20: #{tpu_custom_call.1} parent=1 // pred_region
      _
    $region21: #{tpu_custom_call.1} parent=1 // pred_fallthru
      _
    // Predicated region
    $region22: #{tpu_custom_call.1} parent=1 // pred_check
      _
    $region23: #{tpu_custom_call.1} parent=1 // pred_check_branch
      %54 = sbr.rel (0) target = $region25
    $region24: #{tpu_custom_call.1} parent=1 // pred_region
      %55 = dma.done [#allocation4], 256
    $region25: #{tpu_custom_call.1} parent=1 // pred_fallthru
      _
    // Predicated region
    $region26: #{tpu_custom_call.1} parent=1 // pred_check
      _
    $region27: #{tpu_custom_call.1} parent=1 // pred_check_branch
      %57 = sbr.rel (0) target = $region29
    $region28: #{tpu_custom_call.1} parent=1 // pred_region
      %58 = dma.done [#allocation7], 2048
    $region29: #{tpu_custom_call.1} parent=1 // pred_fallthru
      _
    // Predicated region
    $region30: #{tpu_custom_call.1} parent=1 // pred_check
      _
    $region31: #{tpu_custom_call.1} parent=1 // pred_check_branch
      %60 = sbr.rel (0) target = $region33
    $region32: #{tpu_custom_call.1} parent=1 // pred_region
      %61 = dma.done [#allocation7], 2048
    $region33: #{tpu_custom_call.1} parent=1 // pred_fallthru
      _
    %p62 = scmp.eq.s32.totalorder 0, 0
    // Predicated region
    $region34: #{tpu_custom_call.1} parent=1 // pred_check
      %p63 = pneg %p62
    $region35: #{tpu_custom_call.1} parent=1 // pred_check_branch
      %65 = sbr.rel (%p63) target = $region37
    $region36: #{tpu_custom_call.1} parent=1 // pred_region
      %66 = vst [vmem:[#allocation2] sm:$0xff] 0.0
      %67 = vst [vmem:[#allocation2 + $0x8] sm:$0xff] 0.0
    $region37: #{tpu_custom_call.1} parent=1 // pred_fallthru
      _
    %v68 = vld [vmem:[#allocation2] sm:$0xff]
    %v69 = vld [vmem:[#allocation2 + $0x8] sm:$0xff]
    %v70 = vld [vmem:[#allocation3] sm:$0xff]
    %v71 = vld [vmem:[#allocation3 + $0x8] sm:$0xff]
    %v72 = vld [vmem:[#allocation6] sm:$0xff]
    %v73 = vld [vmem:[#allocation6 + $0x8] sm:$0xff]
    %v74 = vld [vmem:[#allocation6 + $0x10] sm:$0xff]
    %v75 = vld [vmem:[#allocation6 + $0x18] sm:$0xff]
    %v76 = vld [vmem:[#allocation6 + $0x20] sm:$0xff]
    %v77 = vld [vmem:[#allocation6 + $0x28] sm:$0xff]
    %v78 = vld [vmem:[#allocation6 + $0x30] sm:$0xff]
    %v79 = vld [vmem:[#allocation6 + $0x38] sm:$0xff]
    %v80 = vld [vmem:[#allocation6 + $0x40] sm:$0xff]
    %v81 = vld [vmem:[#allocation6 + $0x48] sm:$0xff]
    %v82 = vld [vmem:[#allocation6 + $0x50] sm:$0xff]
    %v83 = vld [vmem:[#allocation6 + $0x58] sm:$0xff]
    %v84 = vld [vmem:[#allocation6 + $0x60] sm:$0xff]
    %v85 = vld [vmem:[#allocation6 + $0x68] sm:$0xff]
    %v86 = vld [vmem:[#allocation6 + $0x70] sm:$0xff]
    %v87 = vld [vmem:[#allocation6 + $0x78] sm:$0xff]
    %88 = vmatprep.subr.mxu0 0.0
    %89 = vmatpush1.msra.mxu0 %v87
    %90 = vmatprep.subr.mxu0 0.0
    %91 = vmatpush1.msra.mxu0 %v86
    %92 = vmatprep.subr.mxu0 0.0
    %93 = vmatpush1.msra.mxu0 %v85
    %94 = vmatprep.subr.mxu0 0.0
    %95 = vmatpush1.msra.mxu0 %v84
    %96 = vmatprep.subr.mxu0 0.0
    %97 = vmatpush1.msra.mxu0 %v83
    %98 = vmatprep.subr.mxu0 0.0
    %99 = vmatpush1.msra.mxu0 %v82
    %100 = vmatprep.subr.mxu0 0.0
    %101 = vmatpush1.msra.mxu0 %v81
    %102 = vmatprep.subr.mxu0 0.0
    %103 = vmatpush1.msra.mxu0 %v80
    %104 = vmatprep.subr.mxu0 0.0
    %105 = vmatpush1.msra.mxu0 %v79
    %106 = vmatprep.subr.mxu0 0.0
    %107 = vmatpush1.msra.mxu0 %v78
    %108 = vmatprep.subr.mxu0 0.0
    %109 = vmatpush1.msra.mxu0 %v77
    %110 = vmatprep.subr.mxu0 0.0
    %111 = vmatpush1.msra.mxu0 %v76
    %112 = vmatprep.subr.mxu0 0.0
    %113 = vmatpush1.msra.mxu0 %v75
    %114 = vmatprep.subr.mxu0 0.0
    %115 = vmatpush1.msra.mxu0 %v74
    %116 = vmatprep.subr.mxu0 0.0
    %117 = vmatpush1.msra.mxu0 %v73
    %118 = vmatprep.subr.mxu0 0.0
    %119 = vmatpush1.msra.mxu0 %v72
    %120 = vmatprep.subr.mxu0 0.0
    %121 = vmatpush2.msra.mxu0 0.0
    %122 = vmatprep.subr.mxu0 0.0
    %123 = vmatpush2.msra.mxu0 0.0
    %124 = vmatprep.subr.mxu0 0.0
    %125 = vmatpush2.msra.mxu0 0.0
    %126 = vmatprep.subr.mxu0 0.0
    %127 = vmatpush2.msra.mxu0 0.0
    %128 = vmatprep.subr.mxu0 0.0
    %129 = vmatpush2.msra.mxu0 0.0
    %130 = vmatprep.subr.mxu0 0.0
    %131 = vmatpush2.msra.mxu0 0.0
    %132 = vmatprep.subr.mxu0 0.0
    %133 = vmatpush2.msra.mxu0 0.0
    %134 = vmatprep.subr.mxu0 0.0
    %135 = vmatpush2.msra.mxu0 0.0
    %136 = vmatprep.subr.mxu0 0.0
    %137 = vmatpush2.msra.mxu0 0.0
    %138 = vmatprep.subr.mxu0 0.0
    %139 = vmatpush2.msra.mxu0 0.0
    %140 = vmatprep.subr.mxu0 0.0
    %141 = vmatpush2.msra.mxu0 0.0
    %142 = vmatprep.subr.mxu0 0.0
    %143 = vmatpush2.msra.mxu0 0.0
    %144 = vmatprep.subr.mxu0 0.0
    %145 = vmatpush2.msra.mxu0 0.0
    %146 = vmatprep.subr.mxu0 0.0
    %147 = vmatpush2.msra.mxu0 0.0
    %148 = vmatprep.subr.mxu0 0.0
    %149 = vmatpush2.msra.mxu0 0.0
    %150 = vmatprep.subr.mxu0 0.0
    %151 = vmatpush2.msra.mxu0 0.0
    %152 = vmatprep.mubr.f32.mxu0 0.0
    %153 = vmatmul.mubr.f32.gmra.mxu0 %v70
    %v154 = vpop.f32.mrf.mxu0
    %v155 = vadd.f32 0.0, %v154
    %v156 = vpop.f32.mrf.mxu0
    %157 = vmatprep.mubr.f32.mxu0 0.0
    %158 = vmatmul.mubr.f32.gmra.mxu0 %v71
    %v159 = vpop.f32.mrf.mxu0
    %v160 = vadd.f32 0.0, %v159
    %v161 = vpop.f32.mrf.mxu0
    %162 = vdwg.mxu0
    %v163 = vadd.f32 %v68, %v155
    %v164 = vadd.f32 %v69, %v160
    %165 = vst [vmem:[#allocation2] sm:$0xff] %v163
    %166 = vst [vmem:[#allocation2 + $0x8] sm:$0xff] %v164
    // Predicated region
    $region38: #{tpu_custom_call.1} parent=1 // pred_check
      %p167 = pneg %p62
    $region39: #{tpu_custom_call.1} parent=1 // pred_check_branch
      %169 = sbr.rel (%p167) target = $region41
    $region40: #{tpu_custom_call.1} parent=1 // pred_region
      %v170 = vld [vmem:[#allocation2] sm:$0xff]
      %v171 = vld [vmem:[#allocation2 + $0x8] sm:$0xff]
      %v172 = vld [vmem:[%s2] sm:$0x1]
      %v174 = vlaneseq
      %v175 = vshrl.u32 %v174, 7
      %v176 = vsub.s32 0, %v175
      %v177 = vrot.slane %v172, %v176
      %v179 = vadd.f32 %v170, %v177
      %v180 = vadd.f32 %v171, %v177
      %v181 = vmax.f32 %v179, 0.0
      %v182 = vmax.f32 %v180, 0.0
      %v183 = vld [vmem:[#allocation8] sm:$0xff]
      %v184 = vld [vmem:[#allocation8 + $0x8] sm:$0xff]
      %v185 = vld [vmem:[#allocation8 + $0x10] sm:$0xff]
      %v186 = vld [vmem:[#allocation8 + $0x18] sm:$0xff]
      %v187 = vld [vmem:[#allocation8 + $0x20] sm:$0xff]
      %v188 = vld [vmem:[#allocation8 + $0x28] sm:$0xff]
      %v189 = vld [vmem:[#allocation8 + $0x30] sm:$0xff]
      %v190 = vld [vmem:[#allocation8 + $0x38] sm:$0xff]
      %v191 = vld [vmem:[#allocation8 + $0x40] sm:$0xff]
      %v192 = vld [vmem:[#allocation8 + $0x48] sm:$0xff]
      %v193 = vld [vmem:[#allocation8 + $0x50] sm:$0xff]
      %v194 = vld [vmem:[#allocation8 + $0x58] sm:$0xff]
      %v195 = vld [vmem:[#allocation8 + $0x60] sm:$0xff]
      %v196 = vld [vmem:[#allocation8 + $0x68] sm:$0xff]
      %v197 = vld [vmem:[#allocation8 + $0x70] sm:$0xff]
      %v198 = vld [vmem:[#allocation8 + $0x78] sm:$0xff]
      %v199 = vld [vmem:[%s4] sm:$0x1]
      %v201 = vlaneseq
      %v202 = vshrl.u32 %v201, 7
      %v203 = vsub.s32 0, %v202
      %v204 = vrot.slane %v199, %v203
      %206 = vmatprep.subr.mxu0 0.0
      %207 = vmatpush1.msra.mxu0 %v198
      %208 = vmatprep.subr.mxu0 0.0
      %209 = vmatpush1.msra.mxu0 %v197
      %210 = vmatprep.subr.mxu0 0.0
      %211 = vmatpush1.msra.mxu0 %v196
      %212 = vmatprep.subr.mxu0 0.0
      %213 = vmatpush1.msra.mxu0 %v195
      %214 = vmatprep.subr.mxu0 0.0
      %215 = vmatpush1.msra.mxu0 %v194
      %216 = vmatprep.subr.mxu0 0.0
      %217 = vmatpush1.msra.mxu0 %v193
      %218 = vmatprep.subr.mxu0 0.0
      %219 = vmatpush1.msra.mxu0 %v192
      %220 = vmatprep.subr.mxu0 0.0
      %221 = vmatpush1.msra.mxu0 %v191
      %222 = vmatprep.subr.mxu0 0.0
      %223 = vmatpush1.msra.mxu0 %v190
      %224 = vmatprep.subr.mxu0 0.0
      %225 = vmatpush1.msra.mxu0 %v189
      %226 = vmatprep.subr.mxu0 0.0
      %227 = vmatpush1.msra.mxu0 %v188
      %228 = vmatprep.subr.mxu0 0.0
      %229 = vmatpush1.msra.mxu0 %v187
      %230 = vmatprep.subr.mxu0 0.0
      %231 = vmatpush1.msra.mxu0 %v186
      %232 = vmatprep.subr.mxu0 0.0
      %233 = vmatpush1.msra.mxu0 %v185
      %234 = vmatprep.subr.mxu0 0.0
      %235 = vmatpush1.msra.mxu0 %v184
      %236 = vmatprep.subr.mxu0 0.0
      %237 = vmatpush1.msra.mxu0 %v183
      %238 = vmatprep.subr.mxu0 0.0
      %239 = vmatpush2.msra.mxu0 0.0
      %240 = vmatprep.subr.mxu0 0.0
      %241 = vmatpush2.msra.mxu0 0.0
      %242 = vmatprep.subr.mxu0 0.0
      %243 = vmatpush2.msra.mxu0 0.0
      %244 = vmatprep.subr.mxu0 0.0
      %245 = vmatpush2.msra.mxu0 0.0
      %246 = vmatprep.subr.mxu0 0.0
      %247 = vmatpush2.msra.mxu0 0.0
      %248 = vmatprep.subr.mxu0 0.0
      %249 = vmatpush2.msra.mxu0 0.0
      %250 = vmatprep.subr.mxu0 0.0
      %251 = vmatpush2.msra.mxu0 0.0
      %252 = vmatprep.subr.mxu0 0.0
      %253 = vmatpush2.msra.mxu0 0.0
      %254 = vmatprep.subr.mxu0 0.0
      %255 = vmatpush2.msra.mxu0 0.0
      %256 = vmatprep.subr.mxu0 0.0
      %257 = vmatpush2.msra.mxu0 0.0
      %258 = vmatprep.subr.mxu0 0.0
      %259 = vmatpush2.msra.mxu0 0.0
      %260 = vmatprep.subr.mxu0 0.0
      %261 = vmatpush2.msra.mxu0 0.0
      %262 = vmatprep.subr.mxu0 0.0
      %263 = vmatpush2.msra.mxu0 0.0
      %264 = vmatprep.subr.mxu0 0.0
      %265 = vmatpush2.msra.mxu0 0.0
      %266 = vmatprep.subr.mxu0 0.0
      %267 = vmatpush2.msra.mxu0 0.0
      %268 = vmatprep.subr.mxu0 0.0
      %269 = vmatpush2.msra.mxu0 0.0
      %270 = vmatprep.mubr.f32.mxu0 0.0
      %271 = vmatmul.mubr.f32.gmra.mxu0 %v181
      %v272 = vpop.f32.mrf.mxu0
      %v273 = vadd.f32 %v204, %v272
      %v274 = vpop.f32.mrf.mxu0
      %275 = vmatprep.mubr.f32.mxu0 0.0
      %276 = vmatmul.mubr.f32.gmra.mxu0 %v182
      %v277 = vpop.f32.mrf.mxu0
      %v278 = vadd.f32 %v204, %v277
      %v279 = vpop.f32.mrf.mxu0
      %280 = vdwg.mxu0
      %281 = vst [vmem:[#allocation9] sm:$0xff] %v273
      %282 = vst [vmem:[#allocation9 + $0x8] sm:$0xff] %v278
    $region41: #{tpu_custom_call.1} parent=1 // pred_fallthru
      _
    // Predicated region
    $region42: #{tpu_custom_call.1} parent=1 // pred_check
      _
    $region43: #{tpu_custom_call.1} parent=1 // pred_check_branch
      %284 = sbr.rel (0) target = $region45
    $region44: #{tpu_custom_call.1} parent=1 // pred_region
      %s286 = ssub.s32 256, 256
      %287 = vsyncadd [#allocation5], %s286
      %s288 = sshll.u32 [#allocation9], 4
      %s289 = int_to_ptr.vmem [resolvable:$true] %s288
      %294 = dma.vmem_to_hbm [thread:$0]  %s289, 256, %s5, [#allocation5], 128, 128, 8
    $region45: #{tpu_custom_call.1} parent=1 // pred_fallthru
      _
    // Predicated region
    $region46: #{tpu_custom_call.1} parent=1 // pred_check
      _
    $region47: #{tpu_custom_call.1} parent=1 // pred_check_branch
      %296 = sbr.rel (0) target = $region49
    $region48: #{tpu_custom_call.1} parent=1 // pred_region
      %297 = dma.done [#allocation5], 256
    $region49: #{tpu_custom_call.1} parent=1 // pred_fallthru
      _
    %298 = vsyncpa [#allocation4], 1
    %299 = vsyncpa [#allocation7], 1
    %300 = vsyncpa [#allocation5], 1

</llo_original>
